<compile_context>
chip_gen: v7x
topology: tpu7x:2x2x1
jax: 0.10.0
libtpu: 0.0.40
codegen_flags: <defaults>
</compile_context>

<pallas_src>
import jax
import jax.numpy as jnp
import numpy as np
from jax.experimental import pallas as pl
from jax.experimental.pallas import tpu as pltpu


# --------------------------- Pallas kernel ---------------------------------
def upsample_module_kernel(x_ref, rbig_ref, lhbig_ref, scale_ref, bias_ref, out_ref):
    # x_ref:      (tb, Hi, C*Wi)     bf16, channels folded onto the lane axis
    # rbig_ref:   (3, C*Wi, C*Wo)    bf16, per conv-row-tap (col-interp x conv-col) fold
    # lhbig_ref:  (3, tb*Ho, tb*Hi)  f32, batch-block-diagonal shifted row-interp matrices
    # scale/bias: (1, C*Wo)          f32, folded inference BatchNorm affine (per lane)
    # out_ref:    (tb, Ho, C*Wo)     f32, lane-dense output
    tb, hi, cwi = x_ref.shape
    ho = out_ref.shape[1]
    cwo = out_ref.shape[-1]

    # Fold batch into the matmul M axis (layout-preserving: Hi is a multiple of 8).
    x2 = x_ref[...].reshape(tb * hi, cwi)

    acc = jnp.zeros((tb * ho, cwo), jnp.float32)
    for ky in range(3):                           # 3 conv-row taps, tiny static loop
        # Stage A: width interp + conv columns, batch in M.
        u = jnp.dot(x2, rbig_ref[ky], preferred_element_type=jnp.float32)   # (tb*Hi, C*Wo)
        # Stage B: height interp (+ conv-row shift), batch kept in M via block-diag lhbig.
        acc = acc + jnp.dot(lhbig_ref[ky], u, preferred_element_type=jnp.float32)

    # Folded inference BatchNorm + ReLU, applied once to the whole accumulator (VPU).
    y = jnp.maximum(acc * scale_ref[...] + bias_ref[...], 0.0)
    out_ref[...] = y.reshape(tb, ho, cwo).astype(out_ref.dtype)


# --------------------------- host-side constant folding --------------------
def _interp_matrix(n_in, n_out):
    """Bilinear (align_corners=True) interpolation matrix: up = A @ x."""
    A = np.zeros((n_out, n_in), np.float32)
    if n_in == 1:
        A[:, 0] = 1.0
        return A
    src = np.arange(n_out, dtype=np.float64) * (n_in - 1) / (n_out - 1)
    i0 = np.clip(np.floor(src).astype(np.int64), 0, n_in - 2)
    frac = (src - i0).astype(np.float32)
    A[np.arange(n_out), i0] += 1.0 - frac
    A[np.arange(n_out), i0 + 1] += frac
    return A


def _shift_rows(A, k):
    """out[r, :] = A[r + k, :] when valid, else 0 (encodes the conv zero padding)."""
    n = A.shape[0]
    out = np.zeros_like(A)
    lo, hi = max(0, -k), min(n, n - k)
    out[lo:hi] = A[lo + k:hi + k]
    return out


def _pick_tb(B, Ho):
    """Batch tile: fill the MXU M axis (target tb*Ho ~ 256 for v6e/v7x, >=128 for v5e)
    while keeping >= 2 grid steps when the batch allows it (v7x megacore)."""
    target = max(1, -(-256 // Ho))                       # ceil(256 / Ho)
    divs = [d for d in range(1, B + 1) if B % d == 0]
    tb = max(d for d in divs if d <= target)
    if B // tb < 2:                                      # keep both v7x TCs busy if possible
        two_step = [d for d in divs if B // d >= 2]
        if two_step:
            tb = max(two_step)
    return tb


def upsample_module_pallas(x, conv_w, gamma, beta, run_mean, run_var,
                           *, eps=1e-5, scale_factor=2, tb=None):
    """ReLU(BN(depthwise_conv3x3(bilinear_up_x2(x)))) in NCHW, as one Pallas kernel."""
    B, C, Hi, Wi = x.shape
    assert Hi > 1 and Wi > 1
    Ho, Wo = Hi * scale_factor, Wi * scale_factor
    f32, bf16 = jnp.float32, jnp.bfloat16

    if tb is None:
        tb = _pick_tb(B, Ho)
    assert B % tb == 0

    # ---- fold upsample + depthwise conv + BN into small constants (trace time) ----
    A_h = _interp_matrix(Hi, Ho)                                             # (Ho, Hi)
    A_w = _interp_matrix(Wi, Wo)                                             # (Wo, Wi)
    lh_shift = np.stack([_shift_rows(A_h, ky - 1) for ky in range(3)], 0)    # (3, Ho, Hi)
    sw_a = np.stack([_shift_rows(A_w, kx - 1) for kx in range(3)], 0)        # (3, Wo, Wi)

    # Batch-block-diagonal row interp: lhbig[ky, n*Ho+h, m*Hi+i] = (n==m) * lh_shift[ky,h,i]
    eye_tb = np.eye(tb, dtype=np.float32)
    lhbig = jnp.asarray(
        (eye_tb[None, :, None, :, None] * lh_shift[:, None, :, None, :])
        .reshape(3, tb * Ho, tb * Hi))                                       # f32, fetched once

    k = conv_w.astype(f32).reshape(C, 3, 3)                                  # (C, ky, kx)
    # rw[c,ky,w,j] = sum_kx K[c,ky,kx] * A_w_shift(kx)[w,j]
    rw = jnp.einsum('cyk,kwj->cywj', k, jnp.asarray(sw_a))                   # (C, 3, Wo, Wi)
    rwt = jnp.transpose(rw, (1, 0, 3, 2))                                    # (3, C, Wi, Wo)
    eye_c = jnp.eye(C, dtype=f32)
    # Block-diag over channels: rbig[ky, c*Wi+j, d*Wo+w] = rwt[ky,c,j,w] * (c==d)
    # TODO(synk): block-diag over C wastes (C-1)/C of stage-A MACs; fine at C=4 but move
    # channels to the grid/sublane axis if this module is instantiated with large C.
    rbig = (rwt[:, :, :, None, :] * eye_c[None, :, None, :, None]
            ).reshape(3, C * Wi, C * Wo).astype(bf16)

    scale_c = gamma.astype(f32) / jnp.sqrt(run_var.astype(f32) + eps)
    bias_c = beta.astype(f32) - run_mean.astype(f32) * scale_c
    scale_row = jnp.repeat(scale_c, Wo)[None, :]                             # (1, C*Wo)
    bias_row = jnp.repeat(bias_c, Wo)[None, :]

    # ---- lane-dense bf16 input layout: (B, Hi, C*Wi) ----
    x_lane = jnp.transpose(x, (0, 2, 1, 3)).reshape(B, Hi, C * Wi).astype(bf16)

    out_lane = pl.pallas_call(
        upsample_module_kernel,
        out_shape=jax.ShapeDtypeStruct((B, Ho, C * Wo), f32),
        grid=(B // tb,),
        in_specs=[
            pl.BlockSpec((tb, Hi, C * Wi), lambda b: (b, 0, 0)),
            # Grid-invariant constants (constant index_map -> DMA'd once, never re-fetched):
            pl.BlockSpec((3, C * Wi, C * Wo), lambda b: (0, 0, 0)),
            pl.BlockSpec((3, tb * Ho, tb * Hi), lambda b: (0, 0, 0)),
            pl.BlockSpec((1, C * Wo), lambda b: (0, 0)),
            pl.BlockSpec((1, C * Wo), lambda b: (0, 0)),
        ],
        out_specs=pl.BlockSpec((tb, Ho, C * Wo), lambda b: (b, 0, 0)),
        compiler_params=pltpu.CompilerParams(
            dimension_semantics=("parallel",)),      # batch steps independent -> megacore
    )(x_lane, rbig, lhbig, scale_row, bias_row)

    # back to NCHW
    return jnp.transpose(out_lane.reshape(B, Ho, C, Wo), (0, 2, 1, 3))


# --------------------------- pure-JAX reference -----------------------------
def _bilinear_upsample_ac(x, scale):
    B, C, H, W = x.shape
    Ho, Wo = H * scale, W * scale

    def coords(n_in, n_out):
        i = jnp.arange(n_out, dtype=jnp.float32)
        src = i * (n_in - 1) / (n_out - 1)
        i0 = jnp.clip(jnp.floor(src).astype(jnp.int32), 0, n_in - 2)
        return i0, src - i0

    h0, fh = coords(H, Ho)
    w0, fw = coords(W, Wo)
    xh = x[:, :, h0, :] * (1.0 - fh)[None, None, :, None] \
        + x[:, :, h0 + 1, :] * fh[None, None, :, None]
    return xh[:, :, :, w0] * (1.0 - fw) + xh[:, :, :, w0 + 1] * fw


def upsample_module_reference(x, conv_w, gamma, beta, run_mean, run_var,
                              *, eps=1e-5, scale_factor=2):
    C = x.shape[1]
    up = _bilinear_upsample_ac(x.astype(jnp.float32), scale_factor)
    y = jax.lax.conv_general_dilated(
        up, conv_w.astype(jnp.float32), (1, 1), ((1, 1), (1, 1)),
        dimension_numbers=('NCHW', 'OIHW', 'NCHW'),
        feature_group_count=C,
        precision=jax.lax.Precision.HIGHEST)
    scale = gamma / jnp.sqrt(run_var + eps)
    bias = beta - run_mean * scale
    y = y * scale[None, :, None, None] + bias[None, :, None, None]
    return jnp.maximum(y, 0.0)


# --------------------------- demo / correctness check -----------------------
if __name__ == "__main__":
    B, C, H, W = 8, 4, 16, 16
    key = jax.random.PRNGKey(0)
    ks = jax.random.split(key, 6)

    x = jax.random.normal(ks[0], (B, C, H, W), jnp.float32)
    conv_w = 0.1 * jax.random.normal(ks[1], (C, 1, 3, 3), jnp.float32)   # depthwise, bias=False
    gamma = 1.0 + 0.1 * jax.random.normal(ks[2], (C,), jnp.float32)
    beta = 0.1 * jax.random.normal(ks[3], (C,), jnp.float32)
    run_mean = 0.1 * jax.random.normal(ks[4], (C,), jnp.float32)
    run_var = jax.random.uniform(ks[5], (C,), jnp.float32, 0.5, 1.5)

    out = upsample_module_pallas(x, conv_w, gamma, beta, run_mean, run_var)
    out = jax.block_until_ready(out)

    ref = upsample_module_reference(x, conv_w, gamma, beta, run_mean, run_var)
    # Tolerance covers bf16 activation/constant operands on the MXU (f32 accumulation);
    # structural errors would be orders of magnitude larger.
    np.testing.assert_allclose(np.asarray(out), np.asarray(ref),
                               rtol=2e-2, atol=2e-2)
    print("KERNEL_OK")
</pallas_src>

<mosaic_0001>
module attributes {stable_mosaic.version = 11 : i64} {
  func.func @upsample_module_kernel(%arg0: i32, %arg1: memref<4x16x64xbf16, #tpu.memory_space<vmem>>, %arg2: memref<3x64x128xbf16, #tpu.memory_space<vmem>>, %arg3: memref<3x128x64xf32, #tpu.memory_space<vmem>>, %arg4: memref<1x128xf32, #tpu.memory_space<vmem>>, %arg5: memref<1x128xf32, #tpu.memory_space<vmem>>, %arg6: memref<4x32x128xf32, #tpu.memory_space<vmem>>) attributes {dimension_semantics = [#tpu.dimension_semantics<parallel>], iteration_bounds = array<i64: 2>, scalar_prefetch = 0 : i64, scratch_operands = 0 : i64, tpu.core_type = #tpu.core_type<tc>, window_params = [{transform_indices = @transform_0, window_bounds = array<i64: 4, 16, 64>}, {pipeline_mode = #tpu.pipeline_mode<synchronous>, transform_indices = @transform_1, window_bounds = array<i64: 3, 64, 128>}, {pipeline_mode = #tpu.pipeline_mode<synchronous>, transform_indices = @transform_2, window_bounds = array<i64: 3, 128, 64>}, {pipeline_mode = #tpu.pipeline_mode<synchronous>, transform_indices = @transform_3, window_bounds = array<i64: 1, 128>}, {pipeline_mode = #tpu.pipeline_mode<synchronous>, transform_indices = @transform_4, window_bounds = array<i64: 1, 128>}, {transform_indices = @transform_5, window_bounds = array<i64: 4, 32, 128>}]} {
    %c0 = arith.constant 0 : index
    %c0_0 = arith.constant 0 : index
    %c0_1 = arith.constant 0 : index
    %0 = vector.load %arg1[%c0, %c0_0, %c0_1] : memref<4x16x64xbf16, #tpu.memory_space<vmem>>, vector<4x16x64xbf16>
    %1 = vector.shape_cast %0 : vector<4x16x64xbf16> to vector<64x64xbf16>
    %cst = arith.constant 0.000000e+00 : f32
    %2 = vector.broadcast %cst : f32 to vector<128x128xf32>
    %c0_2 = arith.constant 0 : index
    %c0_3 = arith.constant 0 : index
    %c0_4 = arith.constant 0 : index
    %3 = vector.load %arg2[%c0_2, %c0_3, %c0_4] : memref<3x64x128xbf16, #tpu.memory_space<vmem>>, vector<1x64x128xbf16>
    %4 = vector.shape_cast %3 : vector<1x64x128xbf16> to vector<64x128xbf16>
    %cst_5 = arith.constant dense<0.000000e+00> : vector<64x128xf32>
    %5 = tpu.matmul %1, %4, %cst_5 {dimension_numbers = #tpu.dot_dimension_numbers<[1], [0], [0], [1], [0, 0, 1, 1], [], []>} : vector<64x64xbf16>, vector<64x128xbf16>, vector<64x128xf32> -> vector<64x128xf32>
    %c0_6 = arith.constant 0 : index
    %c0_7 = arith.constant 0 : index
    %c0_8 = arith.constant 0 : index
    %6 = vector.load %arg3[%c0_6, %c0_7, %c0_8] : memref<3x128x64xf32, #tpu.memory_space<vmem>>, vector<1x128x64xf32>
    %7 = vector.shape_cast %6 : vector<1x128x64xf32> to vector<128x64xf32>
    %cst_9 = arith.constant dense<0.000000e+00> : vector<128x128xf32>
    %8 = tpu.matmul %7, %5, %cst_9 {dimension_numbers = #tpu.dot_dimension_numbers<[1], [0], [0], [1], [0, 0, 1, 1], [], []>} : vector<128x64xf32>, vector<64x128xf32>, vector<128x128xf32> -> vector<128x128xf32>
    %9 = arith.addf %2, %8 : vector<128x128xf32>
    %c1 = arith.constant 1 : index
    %c0_10 = arith.constant 0 : index
    %c0_11 = arith.constant 0 : index
    %10 = vector.load %arg2[%c1, %c0_10, %c0_11] : memref<3x64x128xbf16, #tpu.memory_space<vmem>>, vector<1x64x128xbf16>
    %11 = vector.shape_cast %10 : vector<1x64x128xbf16> to vector<64x128xbf16>
    %cst_12 = arith.constant dense<0.000000e+00> : vector<64x128xf32>
    %12 = tpu.matmul %1, %11, %cst_12 {dimension_numbers = #tpu.dot_dimension_numbers<[1], [0], [0], [1], [0, 0, 1, 1], [], []>} : vector<64x64xbf16>, vector<64x128xbf16>, vector<64x128xf32> -> vector<64x128xf32>
    %c1_13 = arith.constant 1 : index
    %c0_14 = arith.constant 0 : index
    %c0_15 = arith.constant 0 : index
    %13 = vector.load %arg3[%c1_13, %c0_14, %c0_15] : memref<3x128x64xf32, #tpu.memory_space<vmem>>, vector<1x128x64xf32>
    %14 = vector.shape_cast %13 : vector<1x128x64xf32> to vector<128x64xf32>
    %cst_16 = arith.constant dense<0.000000e+00> : vector<128x128xf32>
    %15 = tpu.matmul %14, %12, %cst_16 {dimension_numbers = #tpu.dot_dimension_numbers<[1], [0], [0], [1], [0, 0, 1, 1], [], []>} : vector<128x64xf32>, vector<64x128xf32>, vector<128x128xf32> -> vector<128x128xf32>
    %16 = arith.addf %9, %15 : vector<128x128xf32>
    %c2 = arith.constant 2 : index
    %c0_17 = arith.constant 0 : index
    %c0_18 = arith.constant 0 : index
    %17 = vector.load %arg2[%c2, %c0_17, %c0_18] : memref<3x64x128xbf16, #tpu.memory_space<vmem>>, vector<1x64x128xbf16>
    %18 = vector.shape_cast %17 : vector<1x64x128xbf16> to vector<64x128xbf16>
    %cst_19 = arith.constant dense<0.000000e+00> : vector<64x128xf32>
    %19 = tpu.matmul %1, %18, %cst_19 {dimension_numbers = #tpu.dot_dimension_numbers<[1], [0], [0], [1], [0, 0, 1, 1], [], []>} : vector<64x64xbf16>, vector<64x128xbf16>, vector<64x128xf32> -> vector<64x128xf32>
    %c2_20 = arith.constant 2 : index
    %c0_21 = arith.constant 0 : index
    %c0_22 = arith.constant 0 : index
    %20 = vector.load %arg3[%c2_20, %c0_21, %c0_22] : memref<3x128x64xf32, #tpu.memory_space<vmem>>, vector<1x128x64xf32>
    %21 = vector.shape_cast %20 : vector<1x128x64xf32> to vector<128x64xf32>
    %cst_23 = arith.constant dense<0.000000e+00> : vector<128x128xf32>
    %22 = tpu.matmul %21, %19, %cst_23 {dimension_numbers = #tpu.dot_dimension_numbers<[1], [0], [0], [1], [0, 0, 1, 1], [], []>} : vector<128x64xf32>, vector<64x128xf32>, vector<128x128xf32> -> vector<128x128xf32>
    %23 = arith.addf %16, %22 : vector<128x128xf32>
    %c0_24 = arith.constant 0 : index
    %c0_25 = arith.constant 0 : index
    %24 = vector.load %arg4[%c0_24, %c0_25] : memref<1x128xf32, #tpu.memory_space<vmem>>, vector<1x128xf32>
    %25 = vector.broadcast %24 : vector<1x128xf32> to vector<128x128xf32>
    %26 = arith.mulf %23, %25 : vector<128x128xf32>
    %c0_26 = arith.constant 0 : index
    %c0_27 = arith.constant 0 : index
    %27 = vector.load %arg5[%c0_26, %c0_27] : memref<1x128xf32, #tpu.memory_space<vmem>>, vector<1x128xf32>
    %28 = vector.broadcast %27 : vector<1x128xf32> to vector<128x128xf32>
    %29 = arith.addf %26, %28 : vector<128x128xf32>
    %cst_28 = arith.constant 0.000000e+00 : f32
    %30 = vector.broadcast %cst_28 : f32 to vector<128x128xf32>
    %31 = arith.maximumf %29, %30 : vector<128x128xf32>
    %32 = vector.shape_cast %31 : vector<128x128xf32> to vector<4x32x128xf32>
    %c0_29 = arith.constant 0 : index
    %c0_30 = arith.constant 0 : index
    %c0_31 = arith.constant 0 : index
    %33 = vector.load %arg6[%c0_29, %c0_30, %c0_31] : memref<4x32x128xf32, #tpu.memory_space<vmem>>, vector<4x32x128xf32>
    tpu.vector_store %arg6[%c0_29, %c0_30, %c0_31], %32 {strides = array<i32>} : memref<4x32x128xf32, #tpu.memory_space<vmem>>, vector<4x32x128xf32>,
    return
  }
  func.func @transform_0(%arg0: i32) -> (i32, i32, i32) {
    %c0_i32 = arith.constant 0 : i32
    %c0_i32_0 = arith.constant 0 : i32
    %c0_i32_1 = arith.constant 0 : i32
    return %arg0, %c0_i32, %c0_i32_0 : i32, i32, i32
  }
  func.func @transform_1(%arg0: i32) -> (i32, i32, i32) {
    %c0_i32 = arith.constant 0 : i32
    %c0_i32_0 = arith.constant 0 : i32
    %c0_i32_1 = arith.constant 0 : i32
    %c0_i32_2 = arith.constant 0 : i32
    return %c0_i32, %c0_i32_0, %c0_i32_1 : i32, i32, i32
  }
  func.func @transform_2(%arg0: i32) -> (i32, i32, i32) {
    %c0_i32 = arith.constant 0 : i32
    %c0_i32_0 = arith.constant 0 : i32
    %c0_i32_1 = arith.constant 0 : i32
    %c0_i32_2 = arith.constant 0 : i32
    return %c0_i32, %c0_i32_0, %c0_i32_1 : i32, i32, i32
  }
  func.func @transform_3(%arg0: i32) -> (i32, i32) {
    %c0_i32 = arith.constant 0 : i32
    %c0_i32_0 = arith.constant 0 : i32
    %c0_i32_1 = arith.constant 0 : i32
    return %c0_i32, %c0_i32_0 : i32, i32
  }
  func.func @transform_4(%arg0: i32) -> (i32, i32) {
    %c0_i32 = arith.constant 0 : i32
    %c0_i32_0 = arith.constant 0 : i32
    %c0_i32_1 = arith.constant 0 : i32
    return %c0_i32, %c0_i32_0 : i32, i32
  }
  func.func @transform_5(%arg0: i32) -> (i32, i32, i32) {
    %c0_i32 = arith.constant 0 : i32
    %c0_i32_0 = arith.constant 0 : i32
    %c0_i32_1 = arith.constant 0 : i32
    return %arg0, %c0_i32, %c0_i32_0 : i32, i32, i32
  }
}

</mosaic_0001>

<llo_original>
// kernel: tpu_custom_call.1
$region0: #{tpu_custom_call.1}
  #allocation0 [shape = 'u32[]', space=smem, size = 0x4, offset = 0x4, fixed_abs, tag = 'smem constant byte address 0x4 - core index']
  #allocation1 [shape = 'u32[144,128]{1,0:T(1,128)}', space=vmem, size = 0x12000, scoped, tag = 'internal scratch']
  %s0 = inlined_call_operand.vmem [shape: bf16[8,16,64], index: 0, kind: input, shape index: {}]
  %s1 = inlined_call_operand.vmem [shape: bf16[3,64,128], index: 1, kind: input, shape index: {}]
  %s2 = inlined_call_operand.vmem [shape: f32[3,128,64], index: 2, kind: input, shape index: {}]
  %s3 = inlined_call_operand.vmem [shape: f32[1,128], index: 3, kind: input, shape index: {}]
  %s4 = inlined_call_operand.vmem [shape: f32[1,128], index: 4, kind: input, shape index: {}]
  %s5 = inlined_call_operand.hbm [shape: f32[8,32,128], index: 5, kind: output, shape index: {}]
  %s6 = sld [smem:[#allocation0]]
  $region53: #{tpu_custom_call.1} parent=0
    _
  %s8 = ssub.s32 1, %s6
  %s9 = scalar_select 0, %s8, %s6
  $region1: #{tpu_custom_call.1} parent=0
    #allocation2 [shape = 'u8[131072]{0}', space=vmem, size = 0x20000, scoped, tag = 'output window, operand 0']
    #allocation3 [shape = 's32[2]{0}', space=sflag, size = 0x8, scoped, tag = 'scoped memory for tpu_custom_call.1']
    %10 = vsyncpa [#allocation3], 0
    %s11 = scalar_lea.sflag [#allocation3], 1
    %12 = vsyncpa %s11, 0
    loop: start=0, step=1, limit=4
    $region2: #{tpu_custom_call.1} parent=1 // loop_pre_header
      _
    $region3: #{tpu_custom_call.1} parent=1 // loop_header
      %s14 = sphi 0, %s18
      %p15 = scmp.ge.s32.totalorder %s14, 4
      %s24 = sphi 0, %s26
      %s27 = sphi 0, %s24
      %s28 = sphi 0, %s27
      %s44 = sphi 0, %s28
      %s48 = sphi 0, %s48
      %s50 = sphi 0, %s48
      %s51 = sphi 0, %s50
      %s65 = sphi 0, %s51
      %s69 = sphi 0, %s69
      %s71 = sphi 0, %s69
      %s72 = sphi 0, %s71
      %s86 = sphi 0, %s72
      %s90 = sphi 0, %s90
      %s92 = sphi 0, %s90
      %s93 = sphi 0, %s92
      %s107 = sphi 0, %s93
      %s111 = sphi 0, %s111
      %s113 = sphi 0, %s111
      %s114 = sphi 0, %s113
      %s128 = sphi 0, %s114
      %s134 = sphi 0, %s136
      %s137 = sphi 0, %s134
      %s138 = sphi 0, %s137
      %s154 = sphi 0, %s138
    $region4: #{tpu_custom_call.1} parent=1 // loop_header_branch
      %17 = sbr.rel (%p15) target = $region8
    $region5: #{tpu_custom_call.1} parent=1 // loop_body
      %s19 = ssub.s32 %s14, 1
      %s20 = ssub.s32 %s14, 2
      %s21 = sadd.s32 %s14, 1
      %s22 = ssub.s32 %s14, %s21
      %p23 = scmp.eq.s32.totalorder %s22, 0
      %s25 = sadd.s32 %s24, 1
      %s26 = scalar_select %p23, %s24, %s25
      %p29 = pneg %p23
      %p30 = scmp.eq.s32.totalorder %s14, 1
      %p31 = por %p29, %p30
      %p32 = scmp.ne.s32.totalorder %s24, %s27
      %p33 = scmp.eq.s32.totalorder %s14, 0
      %p34 = por %p32, %p33
      %p35 = scmp.ne.s32.totalorder %s24, %s27
      %p36 = scmp.eq.s32.totalorder %s19, 1
      %p37 = por %p35, %p36
      %p38 = scmp.ne.s32.totalorder %s27, %s28
      %p39 = scmp.eq.s32.totalorder %s19, 0
      %p40 = por %p38, %p39
      %p41 = scmp.ne.s32.totalorder %s27, %s28
      %p42 = scmp.eq.s32.totalorder %s20, 1
      %p43 = por %p41, %p42
      %p45 = scmp.ne.s32.totalorder %s28, %s44
      %p46 = scmp.eq.s32.totalorder %s20, 0
      %p47 = por %p45, %p46
      %s49 = sadd.s32 %s48, 1
      %p52 = scmp.eq.s32.totalorder %s14, 1
      %p53 = scmp.ne.s32.totalorder %s48, %s50
      %p54 = scmp.eq.s32.totalorder %s14, 0
      %p55 = por %p53, %p54
      %p56 = scmp.ne.s32.totalorder %s48, %s50
      %p57 = scmp.eq.s32.totalorder %s19, 1
      %p58 = por %p56, %p57
      %p59 = scmp.ne.s32.totalorder %s50, %s51
      %p60 = scmp.eq.s32.totalorder %s19, 0
      %p61 = por %p59, %p60
      %p62 = scmp.ne.s32.totalorder %s50, %s51
      %p63 = scmp.eq.s32.totalorder %s20, 1
      %p64 = por %p62, %p63
      %p66 = scmp.ne.s32.totalorder %s51, %s65
      %p67 = scmp.eq.s32.totalorder %s20, 0
      %p68 = por %p66, %p67
      %s70 = sadd.s32 %s69, 1
      %p73 = scmp.eq.s32.totalorder %s14, 1
      %p74 = scmp.ne.s32.totalorder %s69, %s71
      %p75 = scmp.eq.s32.totalorder %s14, 0
      %p76 = por %p74, %p75
      %p77 = scmp.ne.s32.totalorder %s69, %s71
      %p78 = scmp.eq.s32.totalorder %s19, 1
      %p79 = por %p77, %p78
      %p80 = scmp.ne.s32.totalorder %s71, %s72
      %p81 = scmp.eq.s32.totalorder %s19, 0
      %p82 = por %p80, %p81
      %p83 = scmp.ne.s32.totalorder %s71, %s72
      %p84 = scmp.eq.s32.totalorder %s20, 1
      %p85 = por %p83, %p84
      %p87 = scmp.ne.s32.totalorder %s72, %s86
      %p88 = scmp.eq.s32.totalorder %s20, 0
      %p89 = por %p87, %p88
      %s91 = sadd.s32 %s90, 1
      %p94 = scmp.eq.s32.totalorder %s14, 1
      %p95 = scmp.ne.s32.totalorder %s90, %s92
      %p96 = scmp.eq.s32.totalorder %s14, 0
      %p97 = por %p95, %p96
      %p98 = scmp.ne.s32.totalorder %s90, %s92
      %p99 = scmp.eq.s32.totalorder %s19, 1
      %p100 = por %p98, %p99
      %p101 = scmp.ne.s32.totalorder %s92, %s93
      %p102 = scmp.eq.s32.totalorder %s19, 0
      %p103 = por %p101, %p102
      %p104 = scmp.ne.s32.totalorder %s92, %s93
      %p105 = scmp.eq.s32.totalorder %s20, 1
      %p106 = por %p104, %p105
      %p108 = scmp.ne.s32.totalorder %s93, %s107
      %p109 = scmp.eq.s32.totalorder %s20, 0
      %p110 = por %p108, %p109
      %s112 = sadd.s32 %s111, 1
      %p115 = scmp.eq.s32.totalorder %s14, 1
      %p116 = scmp.ne.s32.totalorder %s111, %s113
      %p117 = scmp.eq.s32.totalorder %s14, 0
      %p118 = por %p116, %p117
      %p119 = scmp.ne.s32.totalorder %s111, %s113
      %p120 = scmp.eq.s32.totalorder %s19, 1
      %p121 = por %p119, %p120
      %p122 = scmp.ne.s32.totalorder %s113, %s114
      %p123 = scmp.eq.s32.totalorder %s19, 0
      %p124 = por %p122, %p123
      %p125 = scmp.ne.s32.totalorder %s113, %s114
      %p126 = scmp.eq.s32.totalorder %s20, 1
      %p127 = por %p125, %p126
      %p129 = scmp.ne.s32.totalorder %s114, %s128
      %p130 = scmp.eq.s32.totalorder %s20, 0
      %p131 = por %p129, %p130
      %s132 = ssub.s32 %s14, %s21
      %p133 = scmp.eq.s32.totalorder %s132, 0
      %s135 = sadd.s32 %s134, 1
      %s136 = scalar_select %p133, %s134, %s135
      %p139 = pneg %p133
      %p140 = scmp.eq.s32.totalorder %s14, 1
      %p141 = por %p139, %p140
      %p142 = scmp.ne.s32.totalorder %s134, %s137
      %p143 = scmp.eq.s32.totalorder %s14, 0
      %p144 = por %p142, %p143
      %p145 = scmp.ne.s32.totalorder %s134, %s137
      %p146 = scmp.eq.s32.totalorder %s19, 1
      %p147 = por %p145, %p146
      %p148 = scmp.ne.s32.totalorder %s137, %s138
      %p149 = scmp.eq.s32.totalorder %s19, 0
      %p150 = por %p148, %p149
      %p151 = scmp.ne.s32.totalorder %s137, %s138
      %p152 = scmp.eq.s32.totalorder %s20, 1
      %p153 = por %p151, %p152
      %p155 = scmp.ne.s32.totalorder %s138, %s154
      %p156 = scmp.eq.s32.totalorder %s20, 0
      %p157 = por %p155, %p156
      %p158 = scmp.le.s32.totalorder 1, %s14
      %p159 = scmp.lt.s32.totalorder %s14, 3
      %p160 = pnand %p158, %p159
      %p161 = pneg %p160
      // Predicated region
      $region9: #{tpu_custom_call.1} parent=5 // pred_check
        _
      $region10: #{tpu_custom_call.1} parent=5 // pred_check_branch
        %163 = sbr.rel (%p160) target = $region12
      $region11: #{tpu_custom_call.1} parent=5 // pred_region
        %s164 = ssub.s32 %s14, 1
        // Predicated region
        $region13: #{tpu_custom_call.1} parent=11 // pred_check
          %p165 = pneg %p61
        $region14: #{tpu_custom_call.1} parent=11 // pred_check_branch
          %167 = sbr.rel (%p165) target = $region16
        $region15: #{tpu_custom_call.1} parent=11 // pred_region
          _
        $region16: #{tpu_custom_call.1} parent=11 // pred_fallthru
          _
        // Predicated region
        $region17: #{tpu_custom_call.1} parent=11 // pred_check
          %p168 = pneg %p82
        $region18: #{tpu_custom_call.1} parent=11 // pred_check_branch
          %170 = sbr.rel (%p168) target = $region20
        $region19: #{tpu_custom_call.1} parent=11 // pred_region
          _
        $region20: #{tpu_custom_call.1} parent=11 // pred_fallthru
          _
        // Predicated region
        $region21: #{tpu_custom_call.1} parent=11 // pred_check
          %p171 = pneg %p103
        $region22: #{tpu_custom_call.1} parent=11 // pred_check_branch
          %173 = sbr.rel (%p171) target = $region24
        $region23: #{tpu_custom_call.1} parent=11 // pred_region
          _
        $region24: #{tpu_custom_call.1} parent=11 // pred_fallthru
          _
        // Predicated region
        $region25: #{tpu_custom_call.1} parent=11 // pred_check
          %p174 = pneg %p124
        $region26: #{tpu_custom_call.1} parent=11 // pred_check_branch
          %176 = sbr.rel (%p174) target = $region28
        $region27: #{tpu_custom_call.1} parent=11 // pred_region
          _
        $region28: #{tpu_custom_call.1} parent=11 // pred_fallthru
          _
      $region12: #{tpu_custom_call.1} parent=5 // pred_fallthru
        _
      %p177 = scmp.lt.s32.totalorder %s14, 2
      // Predicated region
      $region29: #{tpu_custom_call.1} parent=5 // pred_check
        %p178 = pneg %p177
      $region30: #{tpu_custom_call.1} parent=5 // pred_check_branch
        %180 = sbr.rel (%p178) target = $region32
      $region31: #{tpu_custom_call.1} parent=5 // pred_region
        // Predicated region
        $region33: #{tpu_custom_call.1} parent=31 // pred_check
          %p181 = pneg %p34
        $region34: #{tpu_custom_call.1} parent=31 // pred_check_branch
          %183 = sbr.rel (%p181) target = $region36
        $region35: #{tpu_custom_call.1} parent=31 // pred_region
          %s184 = smul.u32 4, %s14
          %p185 = scmp.lt.s32.totalorder %s184, 7
          %s186 = scalar_select %p185, %s184, 7
          %s187 = smul.addr %s186, 2
          %s188 = smul.addr %s187, 4
          %s189 = scalar_lea.vmem %s0, %s188
          %s190 = smul.u32 4, %s14
        $region36: #{tpu_custom_call.1} parent=31 // pred_fallthru
          _
      $region32: #{tpu_custom_call.1} parent=5 // pred_fallthru
        _
      %p191 = scmp.le.s32.totalorder 1, %s14
      %p192 = scmp.lt.s32.totalorder %s14, 3
      %p193 = pnand %p191, %p192
      %p194 = pneg %p193
      // Predicated region
      $region37: #{tpu_custom_call.1} parent=5 // pred_check
        _
      $region38: #{tpu_custom_call.1} parent=5 // pred_check_branch
        %196 = sbr.rel (%p193) target = $region40
      $region39: #{tpu_custom_call.1} parent=5 // pred_region
        %s197 = ssub.s32 %s14, 1
        %s198 = smul.u32 4, %s19
        %p199 = scmp.lt.s32.totalorder %s198, 7
        %s200 = scalar_select %p199, %s198, 7
        %s201 = smul.addr %s200, 2
        %s202 = smul.addr %s201, 4
        %s203 = scalar_lea.vmem %s0, %s202
        %p204 = pneg %p40
        %p205 = pneg %p37
        %p206 = pneg %p61
        %p207 = pneg %p58
        %p208 = pneg %p82
        %p209 = pneg %p79
        %p210 = pneg %p103
        %p211 = pneg %p100
        %p212 = pneg %p124
        %p213 = pneg %p121
        %p214 = pneg %p150
        %p215 = pneg %p147
        %s216 = sand.u32 %s137, 1
        %s217 = scalar_lea.sflag [#allocation3], %s216
        %s218 = sand.u32 %s137, 1
        %s219 = smul.addr %s218, 128
        %s220 = scalar_lea.vmem [#allocation2], %s219
        %s221 = smul.u32 4, %s19
        %p222 = scmp.lt.s32.totalorder %s221, 7
        %s223 = scalar_select %p222, %s221, 7
        %s224 = smul.addr %s223, 2
        %s225 = smul.addr %s224, 4
        %s226 = scalar_lea.vmem %s0, %s225
        %s227 = smul.u32 4, %s19
        %s228 = smul.u32 4, %s19
        %v230 = vld [vmem:[%s226] sm:$0xf]
        %v231 = vld [vmem:[%s226 + $0x4] sm:$0xf]
        %v232 = vld [vmem:[%s226 + $0x8] sm:$0xf]
        %v233 = vld [vmem:[%s226 + $0xc] sm:$0xf]
        %v234 = vld [vmem:[%s226 + $0x10] sm:$0xf]
        %v235 = vld [vmem:[%s226 + $0x14] sm:$0xf]
        %v236 = vld [vmem:[%s226 + $0x18] sm:$0xf]
        %v237 = vld [vmem:[%s226 + $0x1c] sm:$0xf]
        %v238 = vld [vmem:[%s1] sm:$0xf]
        %v239 = vld [vmem:[%s1 + $0x4] sm:$0xf]
        %v240 = vld [vmem:[%s1 + $0x8] sm:$0xf]
        %v241 = vld [vmem:[%s1 + $0xc] sm:$0xf]
        %v242 = vld [vmem:[%s1 + $0x10] sm:$0xf]
        %v243 = vld [vmem:[%s1 + $0x14] sm:$0xf]
        %v244 = vld [vmem:[%s1 + $0x18] sm:$0xf]
        %v245 = vld [vmem:[%s1 + $0x1c] sm:$0xf]
        %v254 = vunpack.c.l.b16 %v230
        %v255 = vunpack.c.l.b16 %v231
        %v256 = vunpack.c.l.b16 %v232
        %v257 = vunpack.c.l.b16 %v233
        %v258 = vunpack.c.l.b16 %v234
        %v259 = vunpack.c.l.b16 %v235
        %v260 = vunpack.c.l.b16 %v236
        %v261 = vunpack.c.l.b16 %v237
        %v262 = vpack.c.b16 %v255, %v254
        %v263 = vpack.c.b16 %v257, %v256
        %v264 = vpack.c.b16 %v259, %v258
        %v265 = vpack.c.b16 %v261, %v260
        %v274 = vunpack.c.l.b16 %v238
        %v275 = vunpack.c.l.b16 %v239
        %v276 = vunpack.c.l.b16 %v240
        %v277 = vunpack.c.l.b16 %v241
        %v278 = vunpack.c.l.b16 %v242
        %v279 = vunpack.c.l.b16 %v243
        %v280 = vunpack.c.l.b16 %v244
        %v281 = vunpack.c.l.b16 %v245
        %v282 = vpack.c.b16 %v275, %v274
        %v283 = vpack.c.b16 %v277, %v276
        %v284 = vpack.c.b16 %v279, %v278
        %v285 = vpack.c.b16 %v281, %v280
        %vm290 = vcmask 523264
        %v292 = vsel %vm290, %v262, 0
        %v295 = vsel %vm290, %v263, 0
        %v298 = vsel %vm290, %v264, 0
        %v301 = vsel %vm290, %v265, 0
        %303 = vmatprep.subr.bf16.mxu0 0
        %304 = vmatpush1.bf16.msra.mxu0 %v282
        %305 = vmatprep.subr.bf16.mxu0 0
        %306 = vmatpush1.bf16.msra.mxu0 %v283
        %307 = vmatprep.subr.bf16.mxu0 0
        %308 = vmatpush1.bf16.msra.mxu0 %v284
        %309 = vmatprep.subr.bf16.mxu0 0
        %310 = vmatpush1.bf16.msra.mxu0 %v285
        %311 = vmatprep.subr.bf16.mxu0 0
        %312 = vmatpush1.bf16.msra.mxu0 0
        %313 = vmatprep.subr.bf16.mxu0 0
        %314 = vmatpush1.bf16.msra.mxu0 0
        %315 = vmatprep.subr.bf16.mxu0 0
        %316 = vmatpush1.bf16.msra.mxu0 0
        %317 = vmatprep.subr.bf16.mxu0 0
        %318 = vmatpush1.bf16.msra.mxu0 0
        %319 = vmatprep.subr.bf16.mxu0 0
        %320 = vmatpush1.bf16.msra.mxu0 0
        %321 = vmatprep.subr.bf16.mxu0 0
        %322 = vmatpush1.bf16.msra.mxu0 0
        %323 = vmatprep.subr.bf16.mxu0 0
        %324 = vmatpush1.bf16.msra.mxu0 0
        %325 = vmatprep.subr.bf16.mxu0 0
        %326 = vmatpush1.bf16.msra.mxu0 0
        %327 = vmatprep.subr.bf16.mxu0 0
        %328 = vmatpush1.bf16.msra.mxu0 0
        %329 = vmatprep.subr.bf16.mxu0 0
        %330 = vmatpush1.bf16.msra.mxu0 0
        %331 = vmatprep.subr.bf16.mxu0 0
        %332 = vmatpush1.bf16.msra.mxu0 0
        %333 = vmatprep.subr.bf16.mxu0 0
        %334 = vmatpush1.bf16.msra.mxu0 0
        %335 = vmatprep.mubr.bf16.mxu0 0
        %336 = vmatmul.mubr.bf16.gmra.mrb[0].mxu0 %v292
        %v337 = vpop.f32.mrb[0].mxu0
        %v338 = vadd.f32 0.0, %v337
        %v339 = vpop.f32.mrb[0].mxu0
        %v340 = vpop.f32.mrb[0].mxu0
        %v341 = vadd.f32 0.0, %v340
        %v342 = vpop.f32.mrb[0].mxu0
        %343 = vmatprep.mubr.bf16.mxu0 0
        %344 = vmatmul.mubr.bf16.gmra.mrb[0].mxu0 %v295
        %v345 = vpop.f32.mrb[0].mxu0
        %v346 = vadd.f32 0.0, %v345
        %v347 = vpop.f32.mrb[0].mxu0
        %v348 = vpop.f32.mrb[0].mxu0
        %v349 = vadd.f32 0.0, %v348
        %v350 = vpop.f32.mrb[0].mxu0
        %351 = vmatprep.mubr.bf16.mxu0 0
        %352 = vmatmul.mubr.bf16.gmra.mrb[0].mxu0 %v298
        %v353 = vpop.f32.mrb[0].mxu0
        %v354 = vadd.f32 0.0, %v353
        %v355 = vpop.f32.mrb[0].mxu0
        %v356 = vpop.f32.mrb[0].mxu0
        %v357 = vadd.f32 0.0, %v356
        %v358 = vpop.f32.mrb[0].mxu0
        %359 = vmatprep.mubr.bf16.mxu0 0
        %360 = vmatmul.mubr.bf16.gmra.mrb[0].mxu0 %v301
        %v361 = vpop.f32.mrb[0].mxu0
        %v362 = vadd.f32 0.0, %v361
        %v363 = vpop.f32.mrb[0].mxu0
        %v364 = vpop.f32.mrb[0].mxu0
        %v365 = vadd.f32 0.0, %v364
        %v366 = vpop.f32.mrb[0].mxu0
        %367 = vdwg.mxu0
        %v368 = vld [vmem:[%s2] sm:$0xff]
        %v369 = vld [vmem:[%s2 + $0x8] sm:$0xff]
        %v370 = vld [vmem:[%s2 + $0x10] sm:$0xff]
        %v371 = vld [vmem:[%s2 + $0x18] sm:$0xff]
        %v372 = vld [vmem:[%s2 + $0x20] sm:$0xff]
        %v373 = vld [vmem:[%s2 + $0x28] sm:$0xff]
        %v374 = vld [vmem:[%s2 + $0x30] sm:$0xff]
        %v375 = vld [vmem:[%s2 + $0x38] sm:$0xff]
        %v376 = vld [vmem:[%s2 + $0x40] sm:$0xff]
        %v377 = vld [vmem:[%s2 + $0x48] sm:$0xff]
        %v378 = vld [vmem:[%s2 + $0x50] sm:$0xff]
        %v379 = vld [vmem:[%s2 + $0x58] sm:$0xff]
        %v380 = vld [vmem:[%s2 + $0x60] sm:$0xff]
        %v381 = vld [vmem:[%s2 + $0x68] sm:$0xff]
        %v382 = vld [vmem:[%s2 + $0x70] sm:$0xff]
        %v383 = vld [vmem:[%s2 + $0x78] sm:$0xff]
        %s384 = scalar_lea.vmem %s1, 32
        %v385 = vld [vmem:[%s384] sm:$0xf]
        %v386 = vld [vmem:[%s384 + $0x4] sm:$0xf]
        %v387 = vld [vmem:[%s384 + $0x8] sm:$0xf]
        %v388 = vld [vmem:[%s384 + $0xc] sm:$0xf]
        %v389 = vld [vmem:[%s384 + $0x10] sm:$0xf]
        %v390 = vld [vmem:[%s384 + $0x14] sm:$0xf]
        %v391 = vld [vmem:[%s384 + $0x18] sm:$0xf]
        %v392 = vld [vmem:[%s384 + $0x1c] sm:$0xf]
        %v401 = vunpack.c.l.b16 %v385
        %v402 = vunpack.c.l.b16 %v386
        %v403 = vunpack.c.l.b16 %v387
        %v404 = vunpack.c.l.b16 %v388
        %v405 = vunpack.c.l.b16 %v389
        %v406 = vunpack.c.l.b16 %v390
        %v407 = vunpack.c.l.b16 %v391
        %v408 = vunpack.c.l.b16 %v392
        %v409 = vpack.c.b16 %v402, %v401
        %v410 = vpack.c.b16 %v404, %v403
        %v411 = vpack.c.b16 %v406, %v405
        %v412 = vpack.c.b16 %v408, %v407
        %417 = vmatprep.subr.bf16.mxu0 0
        %418 = vmatpush1.bf16.msra.mxu0 %v409
        %419 = vmatprep.subr.bf16.mxu0 0
        %420 = vmatpush1.bf16.msra.mxu0 %v410
        %421 = vmatprep.subr.bf16.mxu0 0
        %422 = vmatpush1.bf16.msra.mxu0 %v411
        %423 = vmatprep.subr.bf16.mxu0 0
        %424 = vmatpush1.bf16.msra.mxu0 %v412
        %425 = vmatprep.subr.bf16.mxu0 0
        %426 = vmatpush1.bf16.msra.mxu0 0
        %427 = vmatprep.subr.bf16.mxu0 0
        %428 = vmatpush1.bf16.msra.mxu0 0
        %429 = vmatprep.subr.bf16.mxu0 0
        %430 = vmatpush1.bf16.msra.mxu0 0
        %431 = vmatprep.subr.bf16.mxu0 0
        %432 = vmatpush1.bf16.msra.mxu0 0
        %433 = vmatprep.subr.bf16.mxu0 0
        %434 = vmatpush1.bf16.msra.mxu0 0
        %435 = vmatprep.subr.bf16.mxu0 0
        %436 = vmatpush1.bf16.msra.mxu0 0
        %437 = vmatprep.subr.bf16.mxu0 0
        %438 = vmatpush1.bf16.msra.mxu0 0
        %439 = vmatprep.subr.bf16.mxu0 0
        %440 = vmatpush1.bf16.msra.mxu0 0
        %441 = vmatprep.subr.bf16.mxu0 0
        %442 = vmatpush1.bf16.msra.mxu0 0
        %443 = vmatprep.subr.bf16.mxu0 0
        %444 = vmatpush1.bf16.msra.mxu0 0
        %445 = vmatprep.subr.bf16.mxu0 0
        %446 = vmatpush1.bf16.msra.mxu0 0
        %447 = vmatprep.subr.bf16.mxu0 0
        %448 = vmatpush1.bf16.msra.mxu0 0
        %449 = vmatprep.mubr.bf16.mxu0 0
        %450 = vmatmul.mubr.bf16.gmra.mrb[0].mxu0 %v292
        %v451 = vpop.f32.mrb[0].mxu0
        %v452 = vadd.f32 0.0, %v451
        %v453 = vpop.f32.mrb[0].mxu0
        %v454 = vpop.f32.mrb[0].mxu0
        %v455 = vadd.f32 0.0, %v454
        %v456 = vpop.f32.mrb[0].mxu0
        %457 = vmatprep.mubr.bf16.mxu0 0
        %458 = vmatmul.mubr.bf16.gmra.mrb[0].mxu0 %v295
        %v459 = vpop.f32.mrb[0].mxu0
        %v460 = vadd.f32 0.0, %v459
        %v461 = vpop.f32.mrb[0].mxu0
        %v462 = vpop.f32.mrb[0].mxu0
        %v463 = vadd.f32 0.0, %v462
        %v464 = vpop.f32.mrb[0].mxu0
        %465 = vmatprep.mubr.bf16.mxu0 0
        %466 = vmatmul.mubr.bf16.gmra.mrb[0].mxu0 %v298
        %v467 = vpop.f32.mrb[0].mxu0
        %v468 = vadd.f32 0.0, %v467
        %v469 = vpop.f32.mrb[0].mxu0
        %v470 = vpop.f32.mrb[0].mxu0
        %v471 = vadd.f32 0.0, %v470
        %v472 = vpop.f32.mrb[0].mxu0
        %473 = vmatprep.mubr.bf16.mxu0 0
        %474 = vmatmul.mubr.bf16.gmra.mrb[0].mxu0 %v301
        %v475 = vpop.f32.mrb[0].mxu0
        %v476 = vadd.f32 0.0, %v475
        %v477 = vpop.f32.mrb[0].mxu0
        %v478 = vpop.f32.mrb[0].mxu0
        %v479 = vadd.f32 0.0, %v478
        %v480 = vpop.f32.mrb[0].mxu0
        %481 = vdwg.mxu0
        %s482 = scalar_lea.vmem %s2, 128
        %v483 = vld [vmem:[%s482] sm:$0xff]
        %v484 = vld [vmem:[%s482 + $0x8] sm:$0xff]
        %v485 = vld [vmem:[%s482 + $0x10] sm:$0xff]
        %v486 = vld [vmem:[%s482 + $0x18] sm:$0xff]
        %v487 = vld [vmem:[%s482 + $0x20] sm:$0xff]
        %v488 = vld [vmem:[%s482 + $0x28] sm:$0xff]
        %v489 = vld [vmem:[%s482 + $0x30] sm:$0xff]
        %v490 = vld [vmem:[%s482 + $0x38] sm:$0xff]
        %v491 = vld [vmem:[%s482 + $0x40] sm:$0xff]
        %v492 = vld [vmem:[%s482 + $0x48] sm:$0xff]
        %v493 = vld [vmem:[%s482 + $0x50] sm:$0xff]
        %v494 = vld [vmem:[%s482 + $0x58] sm:$0xff]
        %v495 = vld [vmem:[%s482 + $0x60] sm:$0xff]
        %v496 = vld [vmem:[%s482 + $0x68] sm:$0xff]
        %v497 = vld [vmem:[%s482 + $0x70] sm:$0xff]
        %v498 = vld [vmem:[%s482 + $0x78] sm:$0xff]
        %v500 = vsel %vm290, %v483, 0
        %v503 = vsel %vm290, %v484, 0
        %v506 = vsel %vm290, %v485, 0
        %v509 = vsel %vm290, %v486, 0
        %v512 = vsel %vm290, %v487, 0
        %v515 = vsel %vm290, %v488, 0
        %v518 = vsel %vm290, %v489, 0
        %v521 = vsel %vm290, %v490, 0
        %v524 = vsel %vm290, %v491, 0
        %v527 = vsel %vm290, %v492, 0
        %v530 = vsel %vm290, %v493, 0
        %v533 = vsel %vm290, %v494, 0
        %v536 = vsel %vm290, %v495, 0
        %v539 = vsel %vm290, %v496, 0
        %v542 = vsel %vm290, %v497, 0
        %v545 = vsel %vm290, %v498, 0
        %547 = vmatprep.subr.mxu0 0.0
        %548 = vmatpush1.msra.mxu0 %v452
        %549 = vmatprep.subr.mxu0 0.0
        %550 = vmatpush1.msra.mxu0 %v455
        %551 = vmatprep.subr.mxu0 0.0
        %552 = vmatpush1.msra.mxu0 %v460
        %553 = vmatprep.subr.mxu0 0.0
        %554 = vmatpush1.msra.mxu0 %v463
        %555 = vmatprep.subr.mxu0 0.0
        %556 = vmatpush1.msra.mxu0 %v468
        %557 = vmatprep.subr.mxu0 0.0
        %558 = vmatpush1.msra.mxu0 %v471
        %559 = vmatprep.subr.mxu0 0.0
        %560 = vmatpush1.msra.mxu0 %v476
        %561 = vmatprep.subr.mxu0 0.0
        %562 = vmatpush1.msra.mxu0 %v479
        %563 = vmatprep.subr.mxu0 0.0
        %564 = vmatpush1.msra.mxu0 0.0
        %565 = vmatprep.subr.mxu0 0.0
        %566 = vmatpush1.msra.mxu0 0.0
        %567 = vmatprep.subr.mxu0 0.0
        %568 = vmatpush1.msra.mxu0 0.0
        %569 = vmatprep.subr.mxu0 0.0
        %570 = vmatpush1.msra.mxu0 0.0
        %571 = vmatprep.subr.mxu0 0.0
        %572 = vmatpush1.msra.mxu0 0.0
        %573 = vmatprep.subr.mxu0 0.0
        %574 = vmatpush1.msra.mxu0 0.0
        %575 = vmatprep.subr.mxu0 0.0
        %576 = vmatpush1.msra.mxu0 0.0
        %577 = vmatprep.subr.mxu0 0.0
        %578 = vmatpush1.msra.mxu0 0.0
        %579 = vmatprep.subr.mxu0 0.0
        %580 = vmatpush1.msra.mxu0 0.0
        %581 = vmatprep.subr.mxu0 0.0
        %582 = vmatpush1.msra.mxu0 0.0
        %583 = vmatprep.subr.mxu0 0.0
        %584 = vmatpush1.msra.mxu0 0.0
        %585 = vmatprep.subr.mxu0 0.0
        %586 = vmatpush1.msra.mxu0 0.0
        %587 = vmatprep.subr.mxu0 0.0
        %588 = vmatpush1.msra.mxu0 0.0
        %589 = vmatprep.subr.mxu0 0.0
        %590 = vmatpush1.msra.mxu0 0.0
        %591 = vmatprep.subr.mxu0 0.0
        %592 = vmatpush1.msra.mxu0 0.0
        %593 = vmatprep.subr.mxu0 0.0
        %594 = vmatpush1.msra.mxu0 0.0
        %595 = vmatprep.subr.mxu0 0.0
        %596 = vmatpush1.msra.mxu0 0.0
        %597 = vmatprep.subr.mxu0 0.0
        %598 = vmatpush1.msra.mxu0 0.0
        %599 = vmatprep.subr.mxu0 0.0
        %600 = vmatpush1.msra.mxu0 0.0
        %601 = vmatprep.subr.mxu0 0.0
        %602 = vmatpush1.msra.mxu0 0.0
        %603 = vmatprep.subr.mxu0 0.0
        %604 = vmatpush1.msra.mxu0 0.0
        %605 = vmatprep.subr.mxu0 0.0
        %606 = vmatpush1.msra.mxu0 0.0
        %607 = vmatprep.subr.mxu0 0.0
        %608 = vmatpush1.msra.mxu0 0.0
        %609 = vmatprep.subr.mxu0 0.0
        %610 = vmatpush1.msra.mxu0 0.0
        %611 = vmatprep.mubr.f32.mxu0 0.0
        %612 = vmatmul.mubr.f32.gmra.mrb[0].mxu0 %v500
        %v613 = vpop.f32.mrb[0].mxu0
        %v614 = vadd.f32 0.0, %v613
        %v615 = vpop.f32.mrb[0].mxu0
        %616 = vmatprep.mubr.f32.mxu0 0.0
        %617 = vmatmul.mubr.f32.gmra.mrb[0].mxu0 %v503
        %v618 = vpop.f32.mrb[0].mxu0
        %v619 = vadd.f32 0.0, %v618
        %v620 = vpop.f32.mrb[0].mxu0
        %621 = vmatprep.mubr.f32.mxu0 0.0
        %622 = vmatmul.mubr.f32.gmra.mrb[0].mxu0 %v506
        %v623 = vpop.f32.mrb[0].mxu0
        %v624 = vadd.f32 0.0, %v623
        %v625 = vpop.f32.mrb[0].mxu0
        %626 = vmatprep.mubr.f32.mxu0 0.0
        %627 = vmatmul.mubr.f32.gmra.mrb[0].mxu0 %v509
        %v628 = vpop.f32.mrb[0].mxu0
        %v629 = vadd.f32 0.0, %v628
        %v630 = vpop.f32.mrb[0].mxu0
        %631 = vmatprep.mubr.f32.mxu0 0.0
        %632 = vmatmul.mubr.f32.gmra.mrb[0].mxu0 %v512
        %v633 = vpop.f32.mrb[0].mxu0
        %v634 = vadd.f32 0.0, %v633
        %v635 = vpop.f32.mrb[0].mxu0
        %636 = vmatprep.mubr.f32.mxu0 0.0
        %637 = vmatmul.mubr.f32.gmra.mrb[0].mxu0 %v515
        %v638 = vpop.f32.mrb[0].mxu0
        %v639 = vadd.f32 0.0, %v638
        %v640 = vpop.f32.mrb[0].mxu0
        %641 = vmatprep.mubr.f32.mxu0 0.0
        %642 = vmatmul.mubr.f32.gmra.mrb[0].mxu0 %v518
        %v643 = vpop.f32.mrb[0].mxu0
        %v644 = vadd.f32 0.0, %v643
        %v645 = vpop.f32.mrb[0].mxu0
        %646 = vmatprep.mubr.f32.mxu0 0.0
        %647 = vmatmul.mubr.f32.gmra.mrb[0].mxu0 %v521
        %v648 = vpop.f32.mrb[0].mxu0
        %v649 = vadd.f32 0.0, %v648
        %v650 = vpop.f32.mrb[0].mxu0
        %651 = vmatprep.mubr.f32.mxu0 0.0
        %652 = vmatmul.mubr.f32.gmra.mrb[0].mxu0 %v524
        %v653 = vpop.f32.mrb[0].mxu0
        %v654 = vadd.f32 0.0, %v653
        %v655 = vpop.f32.mrb[0].mxu0
        %656 = vmatprep.mubr.f32.mxu0 0.0
        %657 = vmatmul.mubr.f32.gmra.mrb[0].mxu0 %v527
        %v658 = vpop.f32.mrb[0].mxu0
        %v659 = vadd.f32 0.0, %v658
        %v660 = vpop.f32.mrb[0].mxu0
        %661 = vmatprep.mubr.f32.mxu0 0.0
        %662 = vmatmul.mubr.f32.gmra.mrb[0].mxu0 %v530
        %v663 = vpop.f32.mrb[0].mxu0
        %v664 = vadd.f32 0.0, %v663
        %v665 = vpop.f32.mrb[0].mxu0
        %666 = vmatprep.mubr.f32.mxu0 0.0
        %667 = vmatmul.mubr.f32.gmra.mrb[0].mxu0 %v533
        %v668 = vpop.f32.mrb[0].mxu0
        %v669 = vadd.f32 0.0, %v668
        %v670 = vpop.f32.mrb[0].mxu0
        %671 = vmatprep.mubr.f32.mxu0 0.0
        %672 = vmatmul.mubr.f32.gmra.mrb[0].mxu0 %v536
        %v673 = vpop.f32.mrb[0].mxu0
        %v674 = vadd.f32 0.0, %v673
        %v675 = vpop.f32.mrb[0].mxu0
        %676 = vmatprep.mubr.f32.mxu0 0.0
        %677 = vmatmul.mubr.f32.gmra.mrb[0].mxu0 %v539
        %v678 = vpop.f32.mrb[0].mxu0
        %v679 = vadd.f32 0.0, %v678
        %v680 = vpop.f32.mrb[0].mxu0
        %681 = vmatprep.mubr.f32.mxu0 0.0
        %682 = vmatmul.mubr.f32.gmra.mrb[0].mxu0 %v542
        %v683 = vpop.f32.mrb[0].mxu0
        %v684 = vadd.f32 0.0, %v683
        %v685 = vpop.f32.mrb[0].mxu0
        %686 = vmatprep.mubr.f32.mxu0 0.0
        %687 = vmatmul.mubr.f32.gmra.mrb[0].mxu0 %v545
        %v688 = vpop.f32.mrb[0].mxu0
        %v689 = vadd.f32 0.0, %v688
        %v690 = vpop.f32.mrb[0].mxu0
        %691 = vdwg.mxu0
        %v693 = vsel %vm290, %v368, 0
        %v696 = vsel %vm290, %v369, 0
        %v699 = vsel %vm290, %v370, 0
        %v702 = vsel %vm290, %v371, 0
        %v705 = vsel %vm290, %v372, 0
        %v708 = vsel %vm290, %v373, 0
        %v711 = vsel %vm290, %v374, 0
        %v714 = vsel %vm290, %v375, 0
        %v717 = vsel %vm290, %v376, 0
        %v720 = vsel %vm290, %v377, 0
        %v723 = vsel %vm290, %v378, 0
        %v726 = vsel %vm290, %v379, 0
        %v729 = vsel %vm290, %v380, 0
        %v732 = vsel %vm290, %v381, 0
        %v735 = vsel %vm290, %v382, 0
        %v738 = vsel %vm290, %v383, 0
        %740 = vmatprep.subr.mxu0 0.0
        %741 = vmatpush1.msra.mxu0 %v338
        %742 = vmatprep.subr.mxu0 0.0
        %743 = vmatpush1.msra.mxu0 %v341
        %744 = vmatprep.subr.mxu0 0.0
        %745 = vmatpush1.msra.mxu0 %v346
        %746 = vmatprep.subr.mxu0 0.0
        %747 = vmatpush1.msra.mxu0 %v349
        %748 = vmatprep.subr.mxu0 0.0
        %749 = vmatpush1.msra.mxu0 %v354
        %750 = vmatprep.subr.mxu0 0.0
        %751 = vmatpush1.msra.mxu0 %v357
        %752 = vmatprep.subr.mxu0 0.0
        %753 = vmatpush1.msra.mxu0 %v362
        %754 = vmatprep.subr.mxu0 0.0
        %755 = vmatpush1.msra.mxu0 %v365
        %756 = vmatprep.subr.mxu0 0.0
        %757 = vmatpush1.msra.mxu0 0.0
        %758 = vmatprep.subr.mxu0 0.0
        %759 = vmatpush1.msra.mxu0 0.0
        %760 = vmatprep.subr.mxu0 0.0
        %761 = vmatpush1.msra.mxu0 0.0
        %762 = vmatprep.subr.mxu0 0.0
        %763 = vmatpush1.msra.mxu0 0.0
        %764 = vmatprep.subr.mxu0 0.0
        %765 = vmatpush1.msra.mxu0 0.0
        %766 = vmatprep.subr.mxu0 0.0
        %767 = vmatpush1.msra.mxu0 0.0
        %768 = vmatprep.subr.mxu0 0.0
        %769 = vmatpush1.msra.mxu0 0.0
        %770 = vmatprep.subr.mxu0 0.0
        %771 = vmatpush1.msra.mxu0 0.0
        %772 = vmatprep.subr.mxu0 0.0
        %773 = vmatpush1.msra.mxu0 0.0
        %774 = vmatprep.subr.mxu0 0.0
        %775 = vmatpush1.msra.mxu0 0.0
        %776 = vmatprep.subr.mxu0 0.0
        %777 = vmatpush1.msra.mxu0 0.0
        %778 = vmatprep.subr.mxu0 0.0
        %779 = vmatpush1.msra.mxu0 0.0
        %780 = vmatprep.subr.mxu0 0.0
        %781 = vmatpush1.msra.mxu0 0.0
        %782 = vmatprep.subr.mxu0 0.0
        %783 = vmatpush1.msra.mxu0 0.0
        %784 = vmatprep.subr.mxu0 0.0
        %785 = vmatpush1.msra.mxu0 0.0
        %786 = vmatprep.subr.mxu0 0.0
        %787 = vmatpush1.msra.mxu0 0.0
        %788 = vmatprep.subr.mxu0 0.0
        %789 = vmatpush1.msra.mxu0 0.0
        %790 = vmatprep.subr.mxu0 0.0
        %791 = vmatpush1.msra.mxu0 0.0
        %792 = vmatprep.subr.mxu0 0.0
        %793 = vmatpush1.msra.mxu0 0.0
        %794 = vmatprep.subr.mxu0 0.0
        %795 = vmatpush1.msra.mxu0 0.0
        %796 = vmatprep.subr.mxu0 0.0
        %797 = vmatpush1.msra.mxu0 0.0
        %798 = vmatprep.subr.mxu0 0.0
        %799 = vmatpush1.msra.mxu0 0.0
        %800 = vmatprep.subr.mxu0 0.0
        %801 = vmatpush1.msra.mxu0 0.0
        %802 = vmatprep.subr.mxu0 0.0
        %803 = vmatpush1.msra.mxu0 0.0
        %804 = vmatprep.mubr.f32.mxu0 0.0
        %805 = vmatmul.mubr.f32.gmra.mrb[0].mxu0 %v693
        %v806 = vpop.f32.mrb[0].mxu0
        %v807 = vadd.f32 %v614, %v806
        %v808 = vpop.f32.mrb[0].mxu0
        %809 = vmatprep.mubr.f32.mxu0 0.0
        %810 = vmatmul.mubr.f32.gmra.mrb[0].mxu0 %v696
        %v811 = vpop.f32.mrb[0].mxu0
        %v812 = vadd.f32 %v619, %v811
        %v813 = vpop.f32.mrb[0].mxu0
        %814 = vmatprep.mubr.f32.mxu0 0.0
        %815 = vmatmul.mubr.f32.gmra.mrb[0].mxu0 %v699
        %v816 = vpop.f32.mrb[0].mxu0
        %v817 = vadd.f32 %v624, %v816
        %v818 = vpop.f32.mrb[0].mxu0
        %819 = vmatprep.mubr.f32.mxu0 0.0
        %820 = vmatmul.mubr.f32.gmra.mrb[0].mxu0 %v702
        %v821 = vpop.f32.mrb[0].mxu0
        %v822 = vadd.f32 %v629, %v821
        %v823 = vpop.f32.mrb[0].mxu0
        %824 = vmatprep.mubr.f32.mxu0 0.0
        %825 = vmatmul.mubr.f32.gmra.mrb[0].mxu0 %v705
        %v826 = vpop.f32.mrb[0].mxu0
        %v827 = vadd.f32 %v634, %v826
        %v828 = vpop.f32.mrb[0].mxu0
        %829 = vmatprep.mubr.f32.mxu0 0.0
        %830 = vmatmul.mubr.f32.gmra.mrb[0].mxu0 %v708
        %v831 = vpop.f32.mrb[0].mxu0
        %v832 = vadd.f32 %v639, %v831
        %v833 = vpop.f32.mrb[0].mxu0
        %834 = vmatprep.mubr.f32.mxu0 0.0
        %835 = vmatmul.mubr.f32.gmra.mrb[0].mxu0 %v711
        %v836 = vpop.f32.mrb[0].mxu0
        %v837 = vadd.f32 %v644, %v836
        %v838 = vpop.f32.mrb[0].mxu0
        %839 = vmatprep.mubr.f32.mxu0 0.0
        %840 = vmatmul.mubr.f32.gmra.mrb[0].mxu0 %v714
        %v841 = vpop.f32.mrb[0].mxu0
        %v842 = vadd.f32 %v649, %v841
        %v843 = vpop.f32.mrb[0].mxu0
        %844 = vmatprep.mubr.f32.mxu0 0.0
        %845 = vmatmul.mubr.f32.gmra.mrb[0].mxu0 %v717
        %v846 = vpop.f32.mrb[0].mxu0
        %v847 = vadd.f32 %v654, %v846
        %v848 = vpop.f32.mrb[0].mxu0
        %849 = vmatprep.mubr.f32.mxu0 0.0
        %850 = vmatmul.mubr.f32.gmra.mrb[0].mxu0 %v720
        %v851 = vpop.f32.mrb[0].mxu0
        %v852 = vadd.f32 %v659, %v851
        %v853 = vpop.f32.mrb[0].mxu0
        %854 = vmatprep.mubr.f32.mxu0 0.0
        %855 = vmatmul.mubr.f32.gmra.mrb[0].mxu0 %v723
        %v856 = vpop.f32.mrb[0].mxu0
        %v857 = vadd.f32 %v664, %v856
        %v858 = vpop.f32.mrb[0].mxu0
        %859 = vmatprep.mubr.f32.mxu0 0.0
        %860 = vmatmul.mubr.f32.gmra.mrb[0].mxu0 %v726
        %v861 = vpop.f32.mrb[0].mxu0
        %v862 = vadd.f32 %v669, %v861
        %v863 = vpop.f32.mrb[0].mxu0
        %864 = vmatprep.mubr.f32.mxu0 0.0
        %865 = vmatmul.mubr.f32.gmra.mrb[0].mxu0 %v729
        %v866 = vpop.f32.mrb[0].mxu0
        %v867 = vadd.f32 %v674, %v866
        %v868 = vpop.f32.mrb[0].mxu0
        %869 = vmatprep.mubr.f32.mxu0 0.0
        %870 = vmatmul.mubr.f32.gmra.mrb[0].mxu0 %v732
        %v871 = vpop.f32.mrb[0].mxu0
        %v872 = vadd.f32 %v679, %v871
        %v873 = vpop.f32.mrb[0].mxu0
        %874 = vmatprep.mubr.f32.mxu0 0.0
        %875 = vmatmul.mubr.f32.gmra.mrb[0].mxu0 %v735
        %v876 = vpop.f32.mrb[0].mxu0
        %v877 = vadd.f32 %v684, %v876
        %v878 = vpop.f32.mrb[0].mxu0
        %879 = vmatprep.mubr.f32.mxu0 0.0
        %880 = vmatmul.mubr.f32.gmra.mrb[0].mxu0 %v738
        %v881 = vpop.f32.mrb[0].mxu0
        %v882 = vadd.f32 %v689, %v881
        %v883 = vpop.f32.mrb[0].mxu0
        %884 = vdwg.mxu0
        %s885 = scalar_lea.vmem %s1, 64
        %v886 = vld [vmem:[%s885] sm:$0xf]
        %v887 = vld [vmem:[%s885 + $0x4] sm:$0xf]
        %v888 = vld [vmem:[%s885 + $0x8] sm:$0xf]
        %v889 = vld [vmem:[%s885 + $0xc] sm:$0xf]
        %v890 = vld [vmem:[%s885 + $0x10] sm:$0xf]
        %v891 = vld [vmem:[%s885 + $0x14] sm:$0xf]
        %v892 = vld [vmem:[%s885 + $0x18] sm:$0xf]
        %v893 = vld [vmem:[%s885 + $0x1c] sm:$0xf]
        %v902 = vunpack.c.l.b16 %v886
        %v903 = vunpack.c.l.b16 %v887
        %v904 = vunpack.c.l.b16 %v888
        %v905 = vunpack.c.l.b16 %v889
        %v906 = vunpack.c.l.b16 %v890
        %v907 = vunpack.c.l.b16 %v891
        %v908 = vunpack.c.l.b16 %v892
        %v909 = vunpack.c.l.b16 %v893
        %v910 = vpack.c.b16 %v903, %v902
        %v911 = vpack.c.b16 %v905, %v904
        %v912 = vpack.c.b16 %v907, %v906
        %v913 = vpack.c.b16 %v909, %v908
        %918 = vmatprep.subr.bf16.mxu0 0
        %919 = vmatpush1.bf16.msra.mxu0 %v910
        %920 = vmatprep.subr.bf16.mxu0 0
        %921 = vmatpush1.bf16.msra.mxu0 %v911
        %922 = vmatprep.subr.bf16.mxu0 0
        %923 = vmatpush1.bf16.msra.mxu0 %v912
        %924 = vmatprep.subr.bf16.mxu0 0
        %925 = vmatpush1.bf16.msra.mxu0 %v913
        %926 = vmatprep.subr.bf16.mxu0 0
        %927 = vmatpush1.bf16.msra.mxu0 0
        %928 = vmatprep.subr.bf16.mxu0 0
        %929 = vmatpush1.bf16.msra.mxu0 0
        %930 = vmatprep.subr.bf16.mxu0 0
        %931 = vmatpush1.bf16.msra.mxu0 0
        %932 = vmatprep.subr.bf16.mxu0 0
        %933 = vmatpush1.bf16.msra.mxu0 0
        %934 = vmatprep.subr.bf16.mxu0 0
        %935 = vmatpush1.bf16.msra.mxu0 0
        %936 = vmatprep.subr.bf16.mxu0 0
        %937 = vmatpush1.bf16.msra.mxu0 0
        %938 = vmatprep.subr.bf16.mxu0 0
        %939 = vmatpush1.bf16.msra.mxu0 0
        %940 = vmatprep.subr.bf16.mxu0 0
        %941 = vmatpush1.bf16.msra.mxu0 0
        %942 = vmatprep.subr.bf16.mxu0 0
        %943 = vmatpush1.bf16.msra.mxu0 0
        %944 = vmatprep.subr.bf16.mxu0 0
        %945 = vmatpush1.bf16.msra.mxu0 0
        %946 = vmatprep.subr.bf16.mxu0 0
        %947 = vmatpush1.bf16.msra.mxu0 0
        %948 = vmatprep.subr.bf16.mxu0 0
        %949 = vmatpush1.bf16.msra.mxu0 0
        %950 = vmatprep.mubr.bf16.mxu0 0
        %951 = vmatmul.mubr.bf16.gmra.mrb[0].mxu0 %v292
        %v952 = vpop.f32.mrb[0].mxu0
        %v953 = vadd.f32 0.0, %v952
        %v954 = vpop.f32.mrb[0].mxu0
        %v955 = vpop.f32.mrb[0].mxu0
        %v956 = vadd.f32 0.0, %v955
        %v957 = vpop.f32.mrb[0].mxu0
        %958 = vmatprep.mubr.bf16.mxu0 0
        %959 = vmatmul.mubr.bf16.gmra.mrb[0].mxu0 %v295
        %v960 = vpop.f32.mrb[0].mxu0
        %v961 = vadd.f32 0.0, %v960
        %v962 = vpop.f32.mrb[0].mxu0
        %v963 = vpop.f32.mrb[0].mxu0
        %v964 = vadd.f32 0.0, %v963
        %v965 = vpop.f32.mrb[0].mxu0
        %966 = vmatprep.mubr.bf16.mxu0 0
        %967 = vmatmul.mubr.bf16.gmra.mrb[0].mxu0 %v298
        %v968 = vpop.f32.mrb[0].mxu0
        %v969 = vadd.f32 0.0, %v968
        %v970 = vpop.f32.mrb[0].mxu0
        %v971 = vpop.f32.mrb[0].mxu0
        %v972 = vadd.f32 0.0, %v971
        %v973 = vpop.f32.mrb[0].mxu0
        %974 = vmatprep.mubr.bf16.mxu0 0
        %975 = vmatmul.mubr.bf16.gmra.mrb[0].mxu0 %v301
        %v976 = vpop.f32.mrb[0].mxu0
        %v977 = vadd.f32 0.0, %v976
        %v978 = vpop.f32.mrb[0].mxu0
        %v979 = vpop.f32.mrb[0].mxu0
        %v980 = vadd.f32 0.0, %v979
        %v981 = vpop.f32.mrb[0].mxu0
        %982 = vdwg.mxu0
        %s983 = scalar_lea.vmem %s2, 256
        %v984 = vld [vmem:[%s983] sm:$0xff]
        %v985 = vld [vmem:[%s983 + $0x8] sm:$0xff]
        %v986 = vld [vmem:[%s983 + $0x10] sm:$0xff]
        %v987 = vld [vmem:[%s983 + $0x18] sm:$0xff]
        %v988 = vld [vmem:[%s983 + $0x20] sm:$0xff]
        %v989 = vld [vmem:[%s983 + $0x28] sm:$0xff]
        %v990 = vld [vmem:[%s983 + $0x30] sm:$0xff]
        %v991 = vld [vmem:[%s983 + $0x38] sm:$0xff]
        %v992 = vld [vmem:[%s983 + $0x40] sm:$0xff]
        %v993 = vld [vmem:[%s983 + $0x48] sm:$0xff]
        %v994 = vld [vmem:[%s983 + $0x50] sm:$0xff]
        %v995 = vld [vmem:[%s983 + $0x58] sm:$0xff]
        %v996 = vld [vmem:[%s983 + $0x60] sm:$0xff]
        %v997 = vld [vmem:[%s983 + $0x68] sm:$0xff]
        %v998 = vld [vmem:[%s983 + $0x70] sm:$0xff]
        %v999 = vld [vmem:[%s983 + $0x78] sm:$0xff]
        %v1001 = vsel %vm290, %v984, 0
        %v1004 = vsel %vm290, %v985, 0
        %v1007 = vsel %vm290, %v986, 0
        %v1010 = vsel %vm290, %v987, 0
        %v1013 = vsel %vm290, %v988, 0
        %v1016 = vsel %vm290, %v989, 0
        %v1019 = vsel %vm290, %v990, 0
        %v1022 = vsel %vm290, %v991, 0
        %v1025 = vsel %vm290, %v992, 0
        %v1028 = vsel %vm290, %v993, 0
        %v1031 = vsel %vm290, %v994, 0
        %v1034 = vsel %vm290, %v995, 0
        %v1037 = vsel %vm290, %v996, 0
        %v1040 = vsel %vm290, %v997, 0
        %v1043 = vsel %vm290, %v998, 0
        %v1046 = vsel %vm290, %v999, 0
        %1048 = vmatprep.subr.mxu0 0.0
        %1049 = vmatpush1.msra.mxu0 %v953
        %1050 = vmatprep.subr.mxu0 0.0
        %1051 = vmatpush1.msra.mxu0 %v956
        %1052 = vmatprep.subr.mxu0 0.0
        %1053 = vmatpush1.msra.mxu0 %v961
        %1054 = vmatprep.subr.mxu0 0.0
        %1055 = vmatpush1.msra.mxu0 %v964
        %1056 = vmatprep.subr.mxu0 0.0
        %1057 = vmatpush1.msra.mxu0 %v969
        %1058 = vmatprep.subr.mxu0 0.0
        %1059 = vmatpush1.msra.mxu0 %v972
        %1060 = vmatprep.subr.mxu0 0.0
        %1061 = vmatpush1.msra.mxu0 %v977
        %1062 = vmatprep.subr.mxu0 0.0
        %1063 = vmatpush1.msra.mxu0 %v980
        %1064 = vmatprep.subr.mxu0 0.0
        %1065 = vmatpush1.msra.mxu0 0.0
        %1066 = vmatprep.subr.mxu0 0.0
        %1067 = vmatpush1.msra.mxu0 0.0
        %1068 = vmatprep.subr.mxu0 0.0
        %1069 = vmatpush1.msra.mxu0 0.0
        %1070 = vmatprep.subr.mxu0 0.0
        %1071 = vmatpush1.msra.mxu0 0.0
        %1072 = vmatprep.subr.mxu0 0.0
        %1073 = vmatpush1.msra.mxu0 0.0
        %1074 = vmatprep.subr.mxu0 0.0
        %1075 = vmatpush1.msra.mxu0 0.0
        %1076 = vmatprep.subr.mxu0 0.0
        %1077 = vmatpush1.msra.mxu0 0.0
        %1078 = vmatprep.subr.mxu0 0.0
        %1079 = vmatpush1.msra.mxu0 0.0
        %1080 = vmatprep.subr.mxu0 0.0
        %1081 = vmatpush1.msra.mxu0 0.0
        %1082 = vmatprep.subr.mxu0 0.0
        %1083 = vmatpush1.msra.mxu0 0.0
        %1084 = vmatprep.subr.mxu0 0.0
        %1085 = vmatpush1.msra.mxu0 0.0
        %1086 = vmatprep.subr.mxu0 0.0
        %1087 = vmatpush1.msra.mxu0 0.0
        %1088 = vmatprep.subr.mxu0 0.0
        %1089 = vmatpush1.msra.mxu0 0.0
        %1090 = vmatprep.subr.mxu0 0.0
        %1091 = vmatpush1.msra.mxu0 0.0
        %1092 = vmatprep.subr.mxu0 0.0
        %1093 = vmatpush1.msra.mxu0 0.0
        %1094 = vmatprep.subr.mxu0 0.0
        %1095 = vmatpush1.msra.mxu0 0.0
        %1096 = vmatprep.subr.mxu0 0.0
        %1097 = vmatpush1.msra.mxu0 0.0
        %1098 = vmatprep.subr.mxu0 0.0
        %1099 = vmatpush1.msra.mxu0 0.0
        %1100 = vmatprep.subr.mxu0 0.0
        %1101 = vmatpush1.msra.mxu0 0.0
        %1102 = vmatprep.subr.mxu0 0.0
        %1103 = vmatpush1.msra.mxu0 0.0
        %1104 = vmatprep.subr.mxu0 0.0
        %1105 = vmatpush1.msra.mxu0 0.0
        %1106 = vmatprep.subr.mxu0 0.0
        %1107 = vmatpush1.msra.mxu0 0.0
        %1108 = vmatprep.subr.mxu0 0.0
        %1109 = vmatpush1.msra.mxu0 0.0
        %1110 = vmatprep.subr.mxu0 0.0
        %1111 = vmatpush1.msra.mxu0 0.0
        %1112 = vmatprep.mubr.f32.mxu0 0.0
        %1113 = vmatmul.mubr.f32.gmra.mrb[0].mxu0 %v1001
        %v1114 = vpop.f32.mrb[0].mxu0
        %v1115 = vadd.f32 0.0, %v1114
        %v1116 = vpop.f32.mrb[0].mxu0
        %1117 = vmatprep.mubr.f32.mxu0 0.0
        %1118 = vmatmul.mubr.f32.gmra.mrb[0].mxu0 %v1004
        %v1119 = vpop.f32.mrb[0].mxu0
        %v1120 = vadd.f32 0.0, %v1119
        %v1121 = vpop.f32.mrb[0].mxu0
        %1122 = vmatprep.mubr.f32.mxu0 0.0
        %1123 = vmatmul.mubr.f32.gmra.mrb[0].mxu0 %v1007
        %v1124 = vpop.f32.mrb[0].mxu0
        %v1125 = vadd.f32 0.0, %v1124
        %v1126 = vpop.f32.mrb[0].mxu0
        %1127 = vmatprep.mubr.f32.mxu0 0.0
        %1128 = vmatmul.mubr.f32.gmra.mrb[0].mxu0 %v1010
        %v1129 = vpop.f32.mrb[0].mxu0
        %v1130 = vadd.f32 0.0, %v1129
        %v1131 = vpop.f32.mrb[0].mxu0
        %1132 = vmatprep.mubr.f32.mxu0 0.0
        %1133 = vmatmul.mubr.f32.gmra.mrb[0].mxu0 %v1013
        %v1134 = vpop.f32.mrb[0].mxu0
        %v1135 = vadd.f32 0.0, %v1134
        %v1136 = vpop.f32.mrb[0].mxu0
        %1137 = vmatprep.mubr.f32.mxu0 0.0
        %1138 = vmatmul.mubr.f32.gmra.mrb[0].mxu0 %v1016
        %v1139 = vpop.f32.mrb[0].mxu0
        %v1140 = vadd.f32 0.0, %v1139
        %v1141 = vpop.f32.mrb[0].mxu0
        %1142 = vmatprep.mubr.f32.mxu0 0.0
        %1143 = vmatmul.mubr.f32.gmra.mrb[0].mxu0 %v1019
        %v1144 = vpop.f32.mrb[0].mxu0
        %v1145 = vadd.f32 0.0, %v1144
        %v1146 = vpop.f32.mrb[0].mxu0
        %1147 = vmatprep.mubr.f32.mxu0 0.0
        %1148 = vmatmul.mubr.f32.gmra.mrb[0].mxu0 %v1022
        %v1149 = vpop.f32.mrb[0].mxu0
        %v1150 = vadd.f32 0.0, %v1149
        %v1151 = vpop.f32.mrb[0].mxu0
        %1152 = vmatprep.mubr.f32.mxu0 0.0
        %1153 = vmatmul.mubr.f32.gmra.mrb[0].mxu0 %v1025
        %v1154 = vpop.f32.mrb[0].mxu0
        %v1155 = vadd.f32 0.0, %v1154
        %v1156 = vpop.f32.mrb[0].mxu0
        %1157 = vmatprep.mubr.f32.mxu0 0.0
        %1158 = vmatmul.mubr.f32.gmra.mrb[0].mxu0 %v1028
        %v1159 = vpop.f32.mrb[0].mxu0
        %v1160 = vadd.f32 0.0, %v1159
        %v1161 = vpop.f32.mrb[0].mxu0
        %1162 = vmatprep.mubr.f32.mxu0 0.0
        %1163 = vmatmul.mubr.f32.gmra.mrb[0].mxu0 %v1031
        %v1164 = vpop.f32.mrb[0].mxu0
        %v1165 = vadd.f32 0.0, %v1164
        %v1166 = vpop.f32.mrb[0].mxu0
        %1167 = vmatprep.mubr.f32.mxu0 0.0
        %1168 = vmatmul.mubr.f32.gmra.mrb[0].mxu0 %v1034
        %v1169 = vpop.f32.mrb[0].mxu0
        %v1170 = vadd.f32 0.0, %v1169
        %v1171 = vpop.f32.mrb[0].mxu0
        %1172 = vmatprep.mubr.f32.mxu0 0.0
        %1173 = vmatmul.mubr.f32.gmra.mrb[0].mxu0 %v1037
        %v1174 = vpop.f32.mrb[0].mxu0
        %v1175 = vadd.f32 0.0, %v1174
        %v1176 = vpop.f32.mrb[0].mxu0
        %1177 = vmatprep.mubr.f32.mxu0 0.0
        %1178 = vmatmul.mubr.f32.gmra.mrb[0].mxu0 %v1040
        %v1179 = vpop.f32.mrb[0].mxu0
        %v1180 = vadd.f32 0.0, %v1179
        %v1181 = vpop.f32.mrb[0].mxu0
        %1182 = vmatprep.mubr.f32.mxu0 0.0
        %1183 = vmatmul.mubr.f32.gmra.mrb[0].mxu0 %v1043
        %v1184 = vpop.f32.mrb[0].mxu0
        %v1185 = vadd.f32 0.0, %v1184
        %v1186 = vpop.f32.mrb[0].mxu0
        %1187 = vmatprep.mubr.f32.mxu0 0.0
        %1188 = vmatmul.mubr.f32.gmra.mrb[0].mxu0 %v1046
        %v1189 = vpop.f32.mrb[0].mxu0
        %v1190 = vadd.f32 0.0, %v1189
        %v1191 = vpop.f32.mrb[0].mxu0
        %1192 = vdwg.mxu0
        %v1193 = vadd.f32 %v807, %v1115
        %v1194 = vadd.f32 %v812, %v1120
        %v1195 = vadd.f32 %v817, %v1125
        %v1196 = vadd.f32 %v822, %v1130
        %v1197 = vadd.f32 %v827, %v1135
        %v1198 = vadd.f32 %v832, %v1140
        %v1199 = vadd.f32 %v837, %v1145
        %v1200 = vadd.f32 %v842, %v1150
        %v1201 = vadd.f32 %v847, %v1155
        %v1202 = vadd.f32 %v852, %v1160
        %v1203 = vadd.f32 %v857, %v1165
        %v1204 = vadd.f32 %v862, %v1170
        %v1205 = vadd.f32 %v867, %v1175
        %v1206 = vadd.f32 %v872, %v1180
        %v1207 = vadd.f32 %v877, %v1185
        %v1208 = vadd.f32 %v882, %v1190
        %v1209 = vld [vmem:[%s3] sm:$0x1]
        %v1211 = vlaneseq
        %v1212 = vshrl.u32 %v1211, 7
        %v1213 = vsub.s32 0, %v1212
        %v1214 = vrot.slane %v1209, %v1213
        %v1216 = vmul.f32 %v1193, %v1214
        %v1217 = vmul.f32 %v1194, %v1214
        %v1218 = vmul.f32 %v1195, %v1214
        %v1219 = vmul.f32 %v1196, %v1214
        %v1220 = vmul.f32 %v1197, %v1214
        %v1221 = vmul.f32 %v1198, %v1214
        %v1222 = vmul.f32 %v1199, %v1214
        %v1223 = vmul.f32 %v1200, %v1214
        %v1224 = vmul.f32 %v1201, %v1214
        %v1225 = vmul.f32 %v1202, %v1214
        %v1226 = vmul.f32 %v1203, %v1214
        %v1227 = vmul.f32 %v1204, %v1214
        %v1228 = vmul.f32 %v1205, %v1214
        %v1229 = vmul.f32 %v1206, %v1214
        %v1230 = vmul.f32 %v1207, %v1214
        %v1231 = vmul.f32 %v1208, %v1214
        %v1232 = vld [vmem:[%s4] sm:$0x1]
        %v1234 = vlaneseq
        %v1235 = vshrl.u32 %v1234, 7
        %v1236 = vsub.s32 0, %v1235
        %v1237 = vrot.slane %v1232, %v1236
        %v1239 = vadd.f32 %v1216, %v1237
        %v1240 = vadd.f32 %v1217, %v1237
        %v1241 = vadd.f32 %v1218, %v1237
        %v1242 = vadd.f32 %v1219, %v1237
        %v1243 = vadd.f32 %v1220, %v1237
        %v1244 = vadd.f32 %v1221, %v1237
        %v1245 = vadd.f32 %v1222, %v1237
        %v1246 = vadd.f32 %v1223, %v1237
        %v1247 = vadd.f32 %v1224, %v1237
        %v1248 = vadd.f32 %v1225, %v1237
        %v1249 = vadd.f32 %v1226, %v1237
        %v1250 = vadd.f32 %v1227, %v1237
        %v1251 = vadd.f32 %v1228, %v1237
        %v1252 = vadd.f32 %v1229, %v1237
        %v1253 = vadd.f32 %v1230, %v1237
        %v1254 = vadd.f32 %v1231, %v1237
        %v1255 = vmax.f32 %v1239, 0.0
        %v1256 = vmax.f32 %v1240, 0.0
        %v1257 = vmax.f32 %v1241, 0.0
        %v1258 = vmax.f32 %v1242, 0.0
        %v1259 = vmax.f32 %v1243, 0.0
        %v1260 = vmax.f32 %v1244, 0.0
        %v1261 = vmax.f32 %v1245, 0.0
        %v1262 = vmax.f32 %v1246, 0.0
        %v1263 = vmax.f32 %v1247, 0.0
        %v1264 = vmax.f32 %v1248, 0.0
        %v1265 = vmax.f32 %v1249, 0.0
        %v1266 = vmax.f32 %v1250, 0.0
        %v1267 = vmax.f32 %v1251, 0.0
        %v1268 = vmax.f32 %v1252, 0.0
        %v1269 = vmax.f32 %v1253, 0.0
        %v1270 = vmax.f32 %v1254, 0.0
        %1271 = vst [vmem:[%s220] sm:$0xff] %v1255
        %1272 = vst [vmem:[%s220 + $0x8] sm:$0xff] %v1256
        %1273 = vst [vmem:[%s220 + $0x10] sm:$0xff] %v1257
        %1274 = vst [vmem:[%s220 + $0x18] sm:$0xff] %v1258
        %1275 = vst [vmem:[%s220 + $0x20] sm:$0xff] %v1259
        %1276 = vst [vmem:[%s220 + $0x28] sm:$0xff] %v1260
        %1277 = vst [vmem:[%s220 + $0x30] sm:$0xff] %v1261
        %1278 = vst [vmem:[%s220 + $0x38] sm:$0xff] %v1262
        %1279 = vst [vmem:[%s220 + $0x40] sm:$0xff] %v1263
        %1280 = vst [vmem:[%s220 + $0x48] sm:$0xff] %v1264
        %1281 = vst [vmem:[%s220 + $0x50] sm:$0xff] %v1265
        %1282 = vst [vmem:[%s220 + $0x58] sm:$0xff] %v1266
        %1283 = vst [vmem:[%s220 + $0x60] sm:$0xff] %v1267
        %1284 = vst [vmem:[%s220 + $0x68] sm:$0xff] %v1268
        %1285 = vst [vmem:[%s220 + $0x70] sm:$0xff] %v1269
        %1286 = vst [vmem:[%s220 + $0x78] sm:$0xff] %v1270
        %s1287 = sand.u32 %s137, 1
        %s1288 = scalar_lea.sflag [#allocation3], %s1287
        %s1289 = sand.u32 %s137, 1
        %s1290 = smul.addr %s1289, 128
        %s1291 = scalar_lea.vmem [#allocation2], %s1290
        // Predicated region
        $region41: #{tpu_custom_call.1} parent=39 // pred_check
          %p1292 = pneg %p147
        $region42: #{tpu_custom_call.1} parent=39 // pred_check_branch
          %1294 = sbr.rel (%p1292) target = $region44
        $region43: #{tpu_custom_call.1} parent=39 // pred_region
          %s1295 = smul.u32 4, %s19
          %s1297 = ssub.s32 2048, 2048
          %1298 = vsyncadd %s1288, %s1297
          %s1299 = smul.addr %s1295, 4
          %s1300 = smul.addr %s1299, 128
          %s1301 = scalar_lea.hbm %s5, %s1300
          %s1302 = sshll.u32 %s1291, 4
          %s1303 = int_to_ptr.vmem [resolvable:$true] %s1302
          %1308 = dma.vmem_to_hbm [thread:$0]  %s1303, 2048, %s1301, %s1288, 128, 128, 8
        $region44: #{tpu_custom_call.1} parent=39 // pred_fallthru
          _
      $region40: #{tpu_custom_call.1} parent=5 // pred_fallthru
        _
      %p1309 = scmp.le.s32.totalorder 2, %s14
      // Predicated region
      $region45: #{tpu_custom_call.1} parent=5 // pred_check
        %p1310 = pneg %p1309
      $region46: #{tpu_custom_call.1} parent=5 // pred_check_branch
        %1312 = sbr.rel (%p1310) target = $region48
      $region47: #{tpu_custom_call.1} parent=5 // pred_region
        %s1313 = ssub.s32 %s14, 2
        // Predicated region
        $region49: #{tpu_custom_call.1} parent=47 // pred_check
          %p1314 = pneg %p153
        $region50: #{tpu_custom_call.1} parent=47 // pred_check_branch
          %1316 = sbr.rel (%p1314) target = $region52
        $region51: #{tpu_custom_call.1} parent=47 // pred_region
          %s1317 = sand.u32 %s138, 1
          %s1318 = scalar_lea.sflag [#allocation3], %s1317
          %s1319 = sand.u32 %s138, 1
          %s1320 = smul.addr %s1319, 128
          %s1321 = scalar_lea.vmem [#allocation2], %s1320
          %1322 = dma.done %s1318, 2048
        $region52: #{tpu_custom_call.1} parent=47 // pred_fallthru
          _
      $region48: #{tpu_custom_call.1} parent=5 // pred_fallthru
        _
    $region6: #{tpu_custom_call.1} parent=1 // loop_footer
      %s18 = sadd.s32 1, %s14
    $region7: #{tpu_custom_call.1} parent=1 // loop_footer_branch
      %13 = sbr.rel target = $region3
    $region8: #{tpu_custom_call.1} parent=1 // loop_exit
      _
    %1323 = vsyncpa [#allocation3], 1
    %s1324 = scalar_lea.sflag [#allocation3], 1
    %1325 = vsyncpa %s1324, 1

</llo_original>
